<compile_context>
chip_gen: v7x
topology: tpu7x:2x2x1
jax: 0.10.0
libtpu: 0.0.40
codegen_flags: <defaults>
</compile_context>

<pallas_src>
import functools
import math

import jax
import jax.numpy as jnp
from jax.experimental import pallas as pl
from jax.experimental.pallas import tpu as pltpu


# ----------------------------- kernels --------------------------------------


def _pe_add_kernel_3d(scale_ref, x_ref, pe_ref, o_ref):
    # x_ref/o_ref: (ts, B, D), pe_ref: (ts, D), scale_ref: SMEM (1,)
    spe = scale_ref[0] * pe_ref[...]                 # pre-scale at (ts, D)
    o_ref[...] = (x_ref[...] + spe[:, None, :]).astype(o_ref.dtype)


def _pe_add_kernel_2d(scale_ref, x_ref, pe_ref, o_ref, *, batch):
    # x_ref/o_ref: (ts, B*D) lane-dense, pe_ref: (ts, D), scale_ref: SMEM (1,)
    spe = scale_ref[0] * pe_ref[...]                 # pre-scale at (ts, D)
    if batch > 1:
        # b-major flattening of (B, D): repeat the D-wide pe row B times
        # along the lane axis.
        pe_wide = jnp.concatenate([spe] * batch, axis=-1)
    else:
        pe_wide = spe
    o_ref[...] = (x_ref[...] + pe_wide).astype(o_ref.dtype)


# ----------------------------- wrapper ---------------------------------------

# Safe on all generations: v5e default scoped VMEM is 16 MiB, v6e/v7x 32 MiB.
_DEFAULT_VMEM_BUDGET_BYTES = 12 * 1024 * 1024


def _choose_seq_tile(S, row_x_bytes, row_pe_bytes, budget_bytes):
    """Largest seq tile whose double-buffered working set fits the budget."""
    # Pipeline buffers per seq row: 2x x-in + 2x out + 2x pe.
    per_row = 4 * row_x_bytes + 2 * row_pe_bytes
    ts = max(1, budget_bytes // per_row)
    # Keep at least 2 grid steps on long sequences (v7x megacore sharding).
    if S >= 16:
        ts = min(ts, -(-S // 2))
    return ts


def positional_encoding_forward(x, pe_table, scale, *, seq_tile=None,
                                vmem_budget_bytes=_DEFAULT_VMEM_BUDGET_BYTES,
                                donate_x=False):
    """x: (S, B, D), pe_table: (max_length, D) f32, scale: (1,) f32."""
    S, B, D = x.shape
    max_len, d_pe = pe_table.shape
    assert d_pe == D, "pe table d_model mismatch"
    assert S <= max_len, "sequence longer than positional-encoding table"

    x_bytes = jnp.dtype(x.dtype).itemsize
    pe_bytes = jnp.dtype(pe_table.dtype).itemsize

    if seq_tile is None:
        ts = _choose_seq_tile(S, B * D * x_bytes, D * pe_bytes,
                              vmem_budget_bytes)
    else:
        ts = max(1, seq_tile)
    ts = min(ts, S)
    if ts < S:
        # (8, 128) rule: a non-full block's sublane dim must be a multiple of 8.
        ts = min(S, max(8, (ts // 8) * 8))

    # pe BlockSpec sublane constraint: block dim must be a multiple of 8 or
    # equal pe's full leading dim. Only the tiny-S fallback needs a slice.
    pe_in = pe_table if (ts % 8 == 0) else pe_table[:S]

    grid = (pl.cdiv(S, ts),)
    io_alias = {1: 0} if donate_x else {}
    cparams = pltpu.CompilerParams(dimension_semantics=("parallel",))

    # Lane-dense 2-D layout when the (B, D) inner tile would under-fill vregs
    # and produce masked stores. Cap the in-kernel concat fan-out at 16.
    lane_dense = ((D % 128 != 0) or (B < 8)) and (B <= 16)

    if lane_dense:
        x_in = x.reshape(S, B * D)          # free metadata reshape (contiguous)
        out = pl.pallas_call(
            functools.partial(_pe_add_kernel_2d, batch=B),
            out_shape=jax.ShapeDtypeStruct((S, B * D), x.dtype),
            grid=grid,
            in_specs=[
                pl.BlockSpec(memory_space=pltpu.MemorySpace.SMEM),   # scale
                pl.BlockSpec((ts, B * D), lambda i: (i, 0)),          # x tile
                pl.BlockSpec((ts, D), lambda i: (i, 0)),              # pe tile
            ],
            out_specs=pl.BlockSpec((ts, B * D), lambda i: (i, 0)),
            compiler_params=cparams,
            input_output_aliases=io_alias,
        )(scale, x_in, pe_in)
        out = out.reshape(S, B, D)
    else:
        out = pl.pallas_call(
            _pe_add_kernel_3d,
            out_shape=jax.ShapeDtypeStruct((S, B, D), x.dtype),
            grid=grid,
            in_specs=[
                pl.BlockSpec(memory_space=pltpu.MemorySpace.SMEM),   # scale
                pl.BlockSpec((ts, B, D), lambda i: (i, 0, 0)),        # x tile
                pl.BlockSpec((ts, D), lambda i: (i, 0)),              # pe tile
            ],
            out_specs=pl.BlockSpec((ts, B, D), lambda i: (i, 0, 0)),
            compiler_params=cparams,
            input_output_aliases=io_alias,
        )(scale, x, pe_in)

    # TODO(synk): nn.Dropout is identity in eval mode; training-mode dropout
    # (random masking + 1/(1-p) rescale) is not applied here.
    return out


def make_pe_table(max_length: int, d_model: int) -> jnp.ndarray:
    """Deterministic sinusoidal table, matches the PyTorch buffer (squeezed)."""
    position = jnp.arange(max_length, dtype=jnp.float32)[:, None]        # (L, 1)
    div_term = jnp.exp(
        jnp.arange(0, d_model, 2, dtype=jnp.float32)
        * (-math.log(10000.0) / d_model))                                # (D/2,)
    angles = position * div_term                                         # (L, D/2)
    pe = jnp.zeros((max_length, d_model), dtype=jnp.float32)
    pe = pe.at[:, 0::2].set(jnp.sin(angles))
    pe = pe.at[:, 1::2].set(jnp.cos(angles))
    return pe                                                            # (L, D)


if __name__ == "__main__":
    S, B, D = 8, 2, 32
    max_length = 64

    key = jax.random.PRNGKey(0)
    x = jax.random.normal(key, (S, B, D), dtype=jnp.float32)

    # Parameters (deterministic init, same as PyTorch __init__):
    scale = jnp.ones((1,), dtype=jnp.float32)       # nn.Parameter(torch.ones(1))
    pe_table = make_pe_table(max_length, D)         # registered buffer 'pe'

    out = positional_encoding_forward(x, pe_table, scale)
    out = jax.block_until_ready(out)

    # Reference check against plain-JAX semantics of the PyTorch forward.
    ref = x + scale[0] * pe_table[:S][:, None, :]
    assert out.shape == (S, B, D)
    assert jnp.allclose(out, ref, atol=1e-6), "mismatch vs reference"

    print("KERNEL_OK")
</pallas_src>

<mosaic_0001>
module attributes {stable_mosaic.version = 11 : i64} {
  func.func @_pe_add_kernel_2d(%arg0: i32, %arg1: memref<1xf32, #tpu.memory_space<smem>>, %arg2: memref<8x64xf32, #tpu.memory_space<vmem>>, %arg3: memref<8x32xf32, #tpu.memory_space<vmem>>, %arg4: memref<8x64xf32, #tpu.memory_space<vmem>>) attributes {dimension_semantics = [#tpu.dimension_semantics<parallel>], iteration_bounds = array<i64: 1>, scalar_prefetch = 0 : i64, scratch_operands = 0 : i64, tpu.core_type = #tpu.core_type<tc>, window_params = [{transform_indices = @transform_0, window_bounds = array<i64: 1>}, {transform_indices = @transform_1, window_bounds = array<i64: 8, 64>}, {transform_indices = @transform_2, window_bounds = array<i64: 8, 32>}, {transform_indices = @transform_3, window_bounds = array<i64: 8, 64>}]} {
    %c0 = arith.constant 0 : index
    %0 = memref.load %arg1[%c0] : memref<1xf32, #tpu.memory_space<smem>>
    %c0_0 = arith.constant 0 : index
    %c0_1 = arith.constant 0 : index
    %1 = vector.load %arg3[%c0_0, %c0_1] : memref<8x32xf32, #tpu.memory_space<vmem>>, vector<8x32xf32>
    %2 = vector.broadcast %0 : f32 to vector<8x32xf32>
    %3 = arith.mulf %2, %1 : vector<8x32xf32>
    %4 = tpu.concatenate %3, %3 in 1 : vector<8x32xf32>, vector<8x32xf32> -> vector<8x64xf32>
    %c0_2 = arith.constant 0 : index
    %c0_3 = arith.constant 0 : index
    %5 = vector.load %arg2[%c0_2, %c0_3] : memref<8x64xf32, #tpu.memory_space<vmem>>, vector<8x64xf32>
    %6 = arith.addf %5, %4 : vector<8x64xf32>
    %c0_4 = arith.constant 0 : index
    %c0_5 = arith.constant 0 : index
    %7 = vector.load %arg4[%c0_4, %c0_5] : memref<8x64xf32, #tpu.memory_space<vmem>>, vector<8x64xf32>
    tpu.vector_store %arg4[%c0_4, %c0_5], %6 {strides = array<i32>} : memref<8x64xf32, #tpu.memory_space<vmem>>, vector<8x64xf32>,
    return
  }
  func.func @transform_0(%arg0: i32) -> i32 {
    %c0_i32 = arith.constant 0 : i32
    %c0_i32_0 = arith.constant 0 : i32
    return %c0_i32 : i32
  }
  func.func @transform_1(%arg0: i32) -> (i32, i32) {
    %c0_i32 = arith.constant 0 : i32
    %c0_i32_0 = arith.constant 0 : i32
    return %arg0, %c0_i32 : i32, i32
  }
  func.func @transform_2(%arg0: i32) -> (i32, i32) {
    %c0_i32 = arith.constant 0 : i32
    %c0_i32_0 = arith.constant 0 : i32
    return %arg0, %c0_i32 : i32, i32
  }
  func.func @transform_3(%arg0: i32) -> (i32, i32) {
    %c0_i32 = arith.constant 0 : i32
    %c0_i32_0 = arith.constant 0 : i32
    return %arg0, %c0_i32 : i32, i32
  }
}

</mosaic_0001>

<llo_original>
// kernel: tpu_custom_call.1
$region0: #{tpu_custom_call.1}
  #allocation0 [shape = 'u32[]', space=smem, size = 0x4, offset = 0x4, fixed_abs, tag = 'smem constant byte address 0x4 - core index']
  #allocation1 [shape = 'u32[144,128]{1,0:T(1,128)}', space=vmem, size = 0x12000, scoped, tag = 'internal scratch']
  #allocation2 [shape = 'f32[1]{0:T(128)S(6)}', space=smem, size = 0x200, scoped, tag = 'scoped memory for tpu_custom_call.1']
  %s0 = inlined_call_operand.<no memory space> [shape: f32[1], index: 0, kind: input, shape index: {}]
  %s1 = inlined_call_operand.vmem [shape: f32[8,64], index: 1, kind: input, shape index: {}]
  %s2 = inlined_call_operand.vmem [shape: f32[64,32], index: 2, kind: input, shape index: {}]
  %s3 = inlined_call_operand.hbm [shape: f32[8,64], index: 3, kind: output, shape index: {}]
  %s4 = sld [smem:[#allocation0]]
  $region22: #{tpu_custom_call.1} parent=0
    _
  %s6 = ssub.s32 1, %s4
  %s7 = scalar_select 0, %s6, %s4
  %8 = sst [smem:[#allocation2]] %s0
  $region1: #{tpu_custom_call.1} parent=0
    #allocation3 [shape = 'u8[4096]{0}', space=vmem, size = 0x1000, scoped, tag = 'output window, operand 0, single buffered']
    #allocation4 [shape = 's32[1]{0}', space=sflag, size = 0x4, scoped, tag = 'scoped memory for tpu_custom_call.1']
    %9 = vsyncpa [#allocation4], 0
    // Predicated region
    $region2: #{tpu_custom_call.1} parent=1 // pred_check
      _
    $region3: #{tpu_custom_call.1} parent=1 // pred_check_branch
      %11 = sbr.rel (0) target = $region5
    $region4: #{tpu_custom_call.1} parent=1 // pred_region
      _
    $region5: #{tpu_custom_call.1} parent=1 // pred_fallthru
      _
    // Predicated region
    $region6: #{tpu_custom_call.1} parent=1 // pred_check
      _
    $region7: #{tpu_custom_call.1} parent=1 // pred_check_branch
      %13 = sbr.rel (0) target = $region9
    $region8: #{tpu_custom_call.1} parent=1 // pred_region
      _
    $region9: #{tpu_custom_call.1} parent=1 // pred_fallthru
      _
    // Predicated region
    $region10: #{tpu_custom_call.1} parent=1 // pred_check
      _
    $region11: #{tpu_custom_call.1} parent=1 // pred_check_branch
      %15 = sbr.rel (0) target = $region13
    $region12: #{tpu_custom_call.1} parent=1 // pred_region
      _
    $region13: #{tpu_custom_call.1} parent=1 // pred_fallthru
      _
    %s16 = sld [smem:[#allocation2]]
    %v17 = vld [vmem:[%s2] sm:$0xff]
    %v18 = vstv %s16
    %v19 = vmul.f32 %v18, %v17
    %21 = vrot.lane.b32.xlu0 %v19, 32
    %v22 = vpop.permute.xlu0 %21
    %vm24 = vcmask 261120
    %v25 = vsel %vm24, %v19, %v22
    %v26 = vld [vmem:[%s1] sm:$0xff]
    %v27 = vadd.f32 %v26, %v25
    %vm28 = vcmask 523264
    %29 = vst.msk [vmem:[#allocation3] sm:$0xff] %vm28, %v27
    // Predicated region
    $region14: #{tpu_custom_call.1} parent=1 // pred_check
      _
    $region15: #{tpu_custom_call.1} parent=1 // pred_check_branch
      %31 = sbr.rel (0) target = $region17
    $region16: #{tpu_custom_call.1} parent=1 // pred_region
      %s33 = ssub.s32 128, 128
      %34 = vsyncadd [#allocation4], %s33
      %s36 = sshll.u32 [#allocation3], 4
      %s37 = int_to_ptr.vmem [resolvable:$true] %s36
      %39 = dma.vmem_to_hbm [thread:$0]  %s37, 128, %s3, [#allocation4]
    $region17: #{tpu_custom_call.1} parent=1 // pred_fallthru
      _
    // Predicated region
    $region18: #{tpu_custom_call.1} parent=1 // pred_check
      _
    $region19: #{tpu_custom_call.1} parent=1 // pred_check_branch
      %41 = sbr.rel (0) target = $region21
    $region20: #{tpu_custom_call.1} parent=1 // pred_region
      %42 = dma.done [#allocation4], 128
    $region21: #{tpu_custom_call.1} parent=1 // pred_fallthru
      _
    %43 = vsyncpa [#allocation4], 1

</llo_original>
